<compile_context>
chip_gen: v7x
topology: tpu7x:2x2x1
jax: 0.10.0
libtpu: 0.0.40
codegen_flags: <defaults>
</compile_context>

<pallas_src>
import functools
import math

import jax
import jax.numpy as jnp
from jax import lax
from jax.experimental import pallas as pl
from jax.experimental.pallas import tpu as pltpu


def _arcface_kernel(flags_ref, x_ref, w_ref, label_ref, out_ref, *,
                    s, cos_m, sin_m, th, mm, easy_margin, tile_n):
    # flags_ref: (nb, nn) int32 in SMEM (scalar-prefetched): 1 iff this
    #            (batch tile, class tile) contains at least one label column.
    # x_ref:     (TB, D)  compute dtype, rows L2-normalized in the wrapper.
    # w_ref:     (TN, D)  compute dtype, rows L2-normalized, streamed over N.
    # label_ref: (TB, 1)  int32, resident across the class grid axis.
    # out_ref:   (TB, TN) lane-dense output tile (last tile store is masked).
    bi = pl.program_id(0)
    jn = pl.program_id(1)

    # cosine = x_n @ w_n.T : contract the feature axis of BOTH operands on the
    # MXU (weight tile never transposed), f32 accumulation.
    cosine = lax.dot_general(
        x_ref[...], w_ref[...],
        dimension_numbers=(((1,), (1,)), ((), ())),
        preferred_element_type=jnp.float32,
    )                                                           # (TB, TN) f32

    has_label = flags_ref[bi, jn] > 0

    @pl.when(has_label)
    def _():
        # one-hot via GLOBAL column index: (1, TN) lane iota vs (TB, 1) label.
        col = jn * tile_n + lax.broadcasted_iota(jnp.int32, (1, tile_n), 1)
        one_hot = col == label_ref[...]                         # (TB, TN) bool

        # clamp guards tiny >1 overshoot from low-precision streaming.
        sine = jnp.sqrt(jnp.maximum(1.0 - cosine * cosine, 0.0))
        phi = cosine * cos_m - sine * sin_m
        if easy_margin:
            phi = jnp.where(cosine > 0.0, phi, cosine)
        else:
            phi = jnp.where(cosine > th, phi, cosine - mm)
        out_ref[...] = (jnp.where(one_hot, phi, cosine) * s).astype(out_ref.dtype)

    @pl.when(jnp.logical_not(has_label))
    def _():
        # No label column in this tile: ArcFace output is exactly s * cosine.
        out_ref[...] = (cosine * s).astype(out_ref.dtype)


def arc_margin_product(x, weight, label, *, s=30.0, m=0.5, easy_margin=False,
                       tile_n=None, compute_dtype=jnp.bfloat16,
                       out_dtype=jnp.float32):
    """x: (B, D), weight: (N, D), label: (B,) int -> (B, N) ArcFace logits."""
    B, D = x.shape
    N, D2 = weight.shape
    assert D == D2
    eps = 1e-12  # F.normalize default eps

    # ---- F.normalize folded into the wrapper-side cast (fuses with pad) -----
    x32 = x.astype(jnp.float32)
    x_n = (x32 * lax.rsqrt(jnp.maximum(
        jnp.sum(x32 * x32, axis=1, keepdims=True), eps * eps))
           ).astype(compute_dtype)
    w32 = weight.astype(jnp.float32)
    w_n = (w32 * lax.rsqrt(jnp.maximum(
        jnp.sum(w32 * w32, axis=1, keepdims=True), eps * eps))
           ).astype(compute_dtype)

    itm = jnp.dtype(compute_dtype).itemsize
    otm = jnp.dtype(out_dtype).itemsize

    # ---- per-generation VMEM budget -----------------------------------------
    try:
        vmem_cap = int(pltpu.get_tpu_info().vmem_capacity_bytes)
    except Exception:  # pragma: no cover - conservative fallback
        vmem_cap = 64 * 1024 * 1024
    budget = int(vmem_cap * 0.6)  # headroom: ~38 MiB of v7x's 64 MiB per TC

    # ---- batch tile: bounds the f32 output tile + epilogue temporaries ------
    tb = B if B <= 256 else 256           # matches v6e/v7x 256-row MXU
    nb = pl.cdiv(B, tb)

    # ---- class tile: ~2 MiB of streamed weight per step, lane-dense ---------
    if tile_n is None:
        target_bytes = 2 * 1024 * 1024
        tn = (target_bytes // max(D * itm, 1)) // 128 * 128
        tn = max(512, min(4096, tn))
    else:
        tn = max(128, (int(tile_n) // 128) * 128)
    tn = min(tn, max(128, pl.cdiv(N, 128) * 128))  # never exceed (rounded) N

    def working_set(tn_):
        return (2 * tn_ * D * itm            # double-buffered weight tile
                + 2 * tb * tn_ * otm         # double-buffered output tile
                + 4 * tb * tn_ * 4           # live f32 epilogue temporaries
                + tb * D * itm + tb * 8)     # resident x / label
    while tn > 128 and working_set(tn) > budget:
        tn -= 128
    vmem_limit = int(min(max(working_set(tn) + (4 << 20), 16 << 20), budget))

    nn = pl.cdiv(N, tn)

    # Pad ONLY the weight rows (<= tn-1 zero rows) so every streamed weight DMA
    # is rectangular; the output keeps its true (B, N) shape.
    n_pad = nn * tn
    if n_pad != N:
        w_n = jnp.pad(w_n, ((0, n_pad - N), (0, 0)))

    label2d = label.astype(jnp.int32).reshape(B, 1)

    # (nb, nn) flags: does this (batch tile, class tile) contain a label?
    rows = jnp.arange(B, dtype=jnp.int32) // tb
    cols = label.astype(jnp.int32) // tn
    flags = jnp.zeros((nb, nn), jnp.int32).at[rows, cols].max(1)

    kernel = functools.partial(
        _arcface_kernel,
        s=float(s), cos_m=math.cos(m), sin_m=math.sin(m),
        th=math.cos(math.pi - m), mm=math.sin(math.pi - m) * m,
        easy_margin=bool(easy_margin), tile_n=tn)

    cost = pl.CostEstimate(
        flops=2 * B * N * D,
        transcendentals=B * N,
        bytes_accessed=N * D * itm + B * N * otm + B * D * itm + B * 4)

    out = pl.pallas_call(
        kernel,
        out_shape=jax.ShapeDtypeStruct((B, N), out_dtype),
        grid_spec=pltpu.PrefetchScalarGridSpec(
            num_scalar_prefetch=1,            # flags -> SMEM
            grid=(nb, nn),
            in_specs=[
                pl.BlockSpec((tb, D), lambda i, j, flags: (i, 0)),   # x_n
                pl.BlockSpec((tn, D), lambda i, j, flags: (j, 0)),   # w_n stream
                pl.BlockSpec((tb, 1), lambda i, j, flags: (i, 0)),   # label
            ],
            out_specs=pl.BlockSpec((tb, tn), lambda i, j, flags: (i, j)),
        ),
        compiler_params=pltpu.CompilerParams(
            dimension_semantics=("parallel", "parallel"),
            vmem_limit_bytes=vmem_limit,
        ),
        cost_estimate=cost,
    )(flags, x_n, w_n, label2d)

    return out


if __name__ == "__main__":
    # Small deterministic example: batch=8, in_features=32, out_features=300
    # (non-multiple of the tile -> exercises the masked final-tile store and
    #  the multi-tile grid with the phi-skip fast path).
    B, D, N = 8, 32, 300
    key = jax.random.PRNGKey(0)
    kx, kw, kl = jax.random.split(key, 3)

    x = jax.random.normal(kx, (B, D), dtype=jnp.float32)

    # xavier_normal_ on weight of shape (out_features, in_features)
    std = math.sqrt(2.0 / (D + N))
    weight = std * jax.random.normal(kw, (N, D), dtype=jnp.float32)

    label = jax.random.randint(kl, (B,), 0, N, dtype=jnp.int32)

    # Reference in plain JAX (same math as the PyTorch module).
    def ref(x, w, lbl, s=30.0, m=0.5, easy_margin=False):
        xn = x / jnp.maximum(jnp.linalg.norm(x, axis=1, keepdims=True), 1e-12)
        wn = w / jnp.maximum(jnp.linalg.norm(w, axis=1, keepdims=True), 1e-12)
        cosine = xn @ wn.T
        sine = jnp.sqrt(jnp.maximum(1.0 - cosine ** 2, 0.0))
        cos_m, sin_m = math.cos(m), math.sin(m)
        th = math.cos(math.pi - m)
        mm = math.sin(math.pi - m) * m
        p = cosine * cos_m - sine * sin_m
        if easy_margin:
            phi = jnp.where(cosine > 0.0, p, cosine)
        else:
            phi = jnp.where(cosine > th, p, cosine - mm)
        one_hot = jax.nn.one_hot(lbl, w.shape[0], dtype=cosine.dtype)
        return (one_hot * phi + (1.0 - one_hot) * cosine) * s

    expected = ref(x, weight, label)

    # f32 path, small forced tile -> multi-tile class grid + masked last store.
    out_f32 = arc_margin_product(x, weight, label, s=30.0, m=0.5,
                                 easy_margin=False, tile_n=128,
                                 compute_dtype=jnp.float32)
    out_f32 = jax.block_until_ready(out_f32)
    assert out_f32.shape == (B, N)
    assert jnp.allclose(out_f32, expected, atol=5e-4, rtol=5e-4), \
        float(jnp.max(jnp.abs(out_f32 - expected)))

    # f32 path, auto-sized tile (single class tile here).
    out_auto = arc_margin_product(x, weight, label, s=30.0, m=0.5,
                                  easy_margin=False,
                                  compute_dtype=jnp.float32)
    out_auto = jax.block_until_ready(out_auto)
    assert out_auto.shape == (B, N)
    assert jnp.allclose(out_auto, expected, atol=5e-4, rtol=5e-4), \
        float(jnp.max(jnp.abs(out_auto - expected)))

    # easy_margin branch.
    expected_em = ref(x, weight, label, easy_margin=True)
    out_em = arc_margin_product(x, weight, label, s=30.0, m=0.5,
                                easy_margin=True, tile_n=128,
                                compute_dtype=jnp.float32)
    out_em = jax.block_until_ready(out_em)
    assert jnp.allclose(out_em, expected_em, atol=5e-4, rtol=5e-4), \
        float(jnp.max(jnp.abs(out_em - expected_em)))

    # bf16-streamed path (production config: bf16 operands, f32 MXU accum);
    # cosine carries ~bf16 quantization error, so the tolerance is looser.
    out_bf16 = arc_margin_product(x, weight, label, s=30.0, m=0.5,
                                  easy_margin=False, tile_n=128,
                                  compute_dtype=jnp.bfloat16)
    out_bf16 = jax.block_until_ready(out_bf16)
    assert out_bf16.shape == (B, N)
    assert jnp.allclose(out_bf16, expected, atol=0.5, rtol=0.05), \
        float(jnp.max(jnp.abs(out_bf16 - expected)))

    print("KERNEL_OK")
</pallas_src>

<mosaic_0001>
module attributes {stable_mosaic.version = 11 : i64} {
  func.func @_arcface_kernel(%arg0: i32, %arg1: i32, %arg2: memref<1x3xi32, #tpu.memory_space<smem>>, %arg3: memref<8x32xf32, #tpu.memory_space<vmem>>, %arg4: memref<128x32xf32, #tpu.memory_space<vmem>>, %arg5: memref<8x1xi32, #tpu.memory_space<vmem>>, %arg6: memref<8x128xf32, #tpu.memory_space<vmem>>) attributes {dimension_semantics = [#tpu.dimension_semantics<parallel>, #tpu.dimension_semantics<parallel>], iteration_bounds = array<i64: 1, 3>, scalar_prefetch = 1 : i64, scratch_operands = 0 : i64, tpu.core_type = #tpu.core_type<tc>, window_params = [{transform_indices = @transform_0, window_bounds = array<i64: 8, 32>}, {transform_indices = @transform_1, window_bounds = array<i64: 128, 32>}, {transform_indices = @transform_2, window_bounds = array<i64: 8, 1>}, {transform_indices = @transform_3, window_bounds = array<i64: 8, 128>}]} {
    %c0 = arith.constant 0 : index
    %c0_0 = arith.constant 0 : index
    %0 = vector.load %arg3[%c0, %c0_0] : memref<8x32xf32, #tpu.memory_space<vmem>>, vector<8x32xf32>
    %c0_1 = arith.constant 0 : index
    %c0_2 = arith.constant 0 : index
    %1 = vector.load %arg4[%c0_1, %c0_2] : memref<128x32xf32, #tpu.memory_space<vmem>>, vector<128x32xf32>
    %cst = arith.constant dense<0.000000e+00> : vector<8x128xf32>
    %2 = tpu.matmul %0, %1, %cst {dimension_numbers = #tpu.dot_dimension_numbers<[1], [1], [0], [0], [0, 0, 1, 0], [], []>} : vector<8x32xf32>, vector<128x32xf32>, vector<8x128xf32> -> vector<8x128xf32>
    %3 = arith.index_cast %arg0 : i32 to index
    %4 = arith.index_cast %arg1 : i32 to index
    %5 = memref.load %arg2[%3, %4] : memref<1x3xi32, #tpu.memory_space<smem>>
    %c0_i32 = arith.constant 0 : i32
    %6 = arith.cmpi sgt, %5, %c0_i32 : i32
    %7 = arith.extui %6 : i1 to i32
    %c0_i32_3 = arith.constant 0 : i32
    %8 = arith.cmpi ne, %7, %c0_i32_3 : i32
    scf.if %8 {
      %c128_i32 = arith.constant 128 : i32
      %12 = arith.muli %arg1, %c128_i32 : i32
      %13 = tpu.iota {dimensions = array<i32: 1>} : vector<1x128xi32>
      %14 = vector.broadcast %12 : i32 to vector<1x128xi32>
      %15 = arith.addi %14, %13 : vector<1x128xi32>
      %c0_5 = arith.constant 0 : index
      %c0_6 = arith.constant 0 : index
      %16 = vector.load %arg5[%c0_5, %c0_6] : memref<8x1xi32, #tpu.memory_space<vmem>>, vector<8x1xi32>
      %17 = vector.broadcast %15 : vector<1x128xi32> to vector<8x128xi32>
      %18 = vector.broadcast %16 : vector<8x1xi32> to vector<8x128xi32>
      %19 = arith.cmpi eq, %17, %18 : vector<8x128xi32>
      %20 = arith.mulf %2, %2 : vector<8x128xf32>
      %cst_7 = arith.constant 1.000000e+00 : f32
      %21 = vector.broadcast %cst_7 : f32 to vector<8x128xf32>
      %22 = arith.subf %21, %20 : vector<8x128xf32>
      %cst_8 = arith.constant 0.000000e+00 : f32
      %23 = vector.broadcast %cst_8 : f32 to vector<8x128xf32>
      %24 = arith.maximumf %22, %23 : vector<8x128xf32>
      %25 = math.sqrt %24 : vector<8x128xf32>
      %cst_9 = arith.constant 0.87758255 : f32
      %26 = vector.broadcast %cst_9 : f32 to vector<8x128xf32>
      %27 = arith.mulf %2, %26 : vector<8x128xf32>
      %cst_10 = arith.constant 0.47942555 : f32
      %28 = vector.broadcast %cst_10 : f32 to vector<8x128xf32>
      %29 = arith.mulf %25, %28 : vector<8x128xf32>
      %30 = arith.subf %27, %29 : vector<8x128xf32>
      %cst_11 = arith.constant -0.87758255 : f32
      %31 = vector.broadcast %cst_11 : f32 to vector<8x128xf32>
      %32 = arith.cmpf ogt, %2, %31 : vector<8x128xf32>
      %cst_12 = arith.constant 0.239712775 : f32
      %33 = vector.broadcast %cst_12 : f32 to vector<8x128xf32>
      %34 = arith.subf %2, %33 : vector<8x128xf32>
      %35 = arith.select %32, %30, %34 : vector<8x128xi1>, vector<8x128xf32>
      %36 = arith.select %19, %35, %2 : vector<8x128xi1>, vector<8x128xf32>
      %cst_13 = arith.constant 3.000000e+01 : f32
      %37 = vector.broadcast %cst_13 : f32 to vector<8x128xf32>
      %38 = arith.mulf %36, %37 : vector<8x128xf32>
      %c0_14 = arith.constant 0 : index
      %c0_15 = arith.constant 0 : index
      %39 = vector.load %arg6[%c0_14, %c0_15] : memref<8x128xf32, #tpu.memory_space<vmem>>, vector<8x128xf32>
      tpu.vector_store %arg6[%c0_14, %c0_15], %38 {strides = array<i32>} : memref<8x128xf32, #tpu.memory_space<vmem>>, vector<8x128xf32>,
    } else {
    }
    %true = arith.constant true
    %9 = arith.xori %6, %true : i1
    %10 = arith.extui %9 : i1 to i32
    %c0_i32_4 = arith.constant 0 : i32
    %11 = arith.cmpi ne, %10, %c0_i32_4 : i32
    scf.if %11 {
      %cst_5 = arith.constant 3.000000e+01 : f32
      %12 = vector.broadcast %cst_5 : f32 to vector<8x128xf32>
      %13 = arith.mulf %2, %12 : vector<8x128xf32>
      %c0_6 = arith.constant 0 : index
      %c0_7 = arith.constant 0 : index
      %14 = vector.load %arg6[%c0_6, %c0_7] : memref<8x128xf32, #tpu.memory_space<vmem>>, vector<8x128xf32>
      tpu.vector_store %arg6[%c0_6, %c0_7], %13 {strides = array<i32>} : memref<8x128xf32, #tpu.memory_space<vmem>>, vector<8x128xf32>,
    } else {
    }
    return
  }
  func.func @transform_0(%arg0: i32, %arg1: i32, %arg2: memref<1x3xi32, #tpu.memory_space<smem>>) -> (i32, i32) {
    %c0_i32 = arith.constant 0 : i32
    %c0_i32_0 = arith.constant 0 : i32
    return %arg0, %c0_i32 : i32, i32
  }
  func.func @transform_1(%arg0: i32, %arg1: i32, %arg2: memref<1x3xi32, #tpu.memory_space<smem>>) -> (i32, i32) {
    %c0_i32 = arith.constant 0 : i32
    %c0_i32_0 = arith.constant 0 : i32
    return %arg1, %c0_i32 : i32, i32
  }
  func.func @transform_2(%arg0: i32, %arg1: i32, %arg2: memref<1x3xi32, #tpu.memory_space<smem>>) -> (i32, i32) {
    %c0_i32 = arith.constant 0 : i32
    %c0_i32_0 = arith.constant 0 : i32
    return %arg0, %c0_i32 : i32, i32
  }
  func.func @transform_3(%arg0: i32, %arg1: i32, %arg2: memref<1x3xi32, #tpu.memory_space<smem>>) -> (i32, i32) {
    %c0_i32 = arith.constant 0 : i32
    return %arg0, %arg1 : i32, i32
  }
}

</mosaic_0001>

<llo_original>
// kernel: tpu_custom_call.1
$region0: #{tpu_custom_call.1}
  #allocation0 [shape = 'u32[]', space=smem, size = 0x4, offset = 0x4, fixed_abs, tag = 'smem constant byte address 0x4 - core index']
  #allocation1 [shape = 'u32[144,128]{1,0:T(1,128)}', space=vmem, size = 0x12000, scoped, tag = 'internal scratch']
  #allocation2 [shape = 's32[1]{0}', space=sflag, size = 0x4, scoped, tag = 'scoped memory for tpu_custom_call.1']
  #allocation3 [shape = 'u8[512]{0}', space=smem, size = 0x200, scoped, tag = 'prefetched SMEM operand 0']
  %s0 = inlined_call_operand.vmem [shape: s32[1,3], index: 0, kind: input, shape index: {}]
  %s1 = inlined_call_operand.vmem [shape: f32[8,32], index: 1, kind: input, shape index: {}]
  %s2 = inlined_call_operand.vmem [shape: f32[384,32], index: 2, kind: input, shape index: {}]
  %s3 = inlined_call_operand.vmem [shape: s32[8,1], index: 3, kind: input, shape index: {}]
  %s4 = inlined_call_operand.hbm [shape: f32[8,300], index: 4, kind: output, shape index: {}]
  %s5 = sld [smem:[#allocation0]]
  $region53: #{tpu_custom_call.1} parent=0
    _
  %s7 = ssub.s32 1, %s5
  %s8 = scalar_select 0, %s7, %s5
  %s9 = sshll.u32 %s0, 4
  %s10 = int_to_ptr.vmem [resolvable:$true] %s9
  %12 = dma.vmem_to_smem %s10, 16, [#allocation3], [#allocation2]
  %13 = dma.done [#allocation2], 16
  %14 = sfence
  $region1: #{tpu_custom_call.1} parent=0
    #allocation4 [shape = 'u8[8192]{0}', space=vmem, size = 0x2000, scoped, tag = 'output window, operand 0']
    #allocation5 [shape = 's32[2]{0}', space=sflag, size = 0x8, scoped, tag = 'scoped memory for tpu_custom_call.1']
    %15 = vsyncpa [#allocation5], 0
    %s16 = scalar_lea.sflag [#allocation5], 1
    %17 = vsyncpa %s16, 0
    loop: start=0, step=1, limit=5
    $region2: #{tpu_custom_call.1} parent=1 // loop_pre_header
      _
    $region3: #{tpu_custom_call.1} parent=1 // loop_header
      %s19 = sphi 0, %s23
      %p20 = scmp.ge.s32.totalorder %s19, 5
      %s26 = sphi 0, %s38
      %s27 = sphi 0, %s34
      %s28 = sphi 0, %s26
      %s29 = sphi 0, %s27
      %s30 = sphi 0, %s28
      %s31 = sphi 0, %s29
      %s41 = sphi 0, %s43
      %s44 = sphi 0, %s41
      %s45 = sphi 0, %s44
      %s61 = sphi 0, %s45
      %s67 = sphi 0, %s69
      %s70 = sphi 0, %s67
      %s71 = sphi 0, %s70
      %s87 = sphi 0, %s71
      %s93 = sphi 0, %s95
      %s96 = sphi 0, %s93
      %s97 = sphi 0, %s96
      %s113 = sphi 0, %s97
      %s121 = sphi 0, %s123
      %s124 = sphi 0, %s121
      %s125 = sphi 0, %s124
      %s141 = sphi 0, %s125
    $region4: #{tpu_custom_call.1} parent=1 // loop_header_branch
      %22 = sbr.rel (%p20) target = $region8
    $region5: #{tpu_custom_call.1} parent=1 // loop_body
      %s24 = ssub.s32 %s19, 1
      %s25 = ssub.s32 %s19, 2
      %s32 = sadd.s32 1, %s27
      %p33 = scmp.ge.s32.totalorder %s32, 3
      %s34 = scalar_select %p33, 0, %s32
      %s35 = sadd.s32 1, %s26
      %s36 = scalar_select %p33, %s35, %s26
      %p37 = scmp.ge.s32.totalorder %s36, 1
      %s38 = scalar_select %p37, 0, %s36
      %s39 = ssub.s32 %s26, %s38
      %p40 = scmp.eq.s32.totalorder %s39, 0
      %s42 = sadd.s32 %s41, 1
      %s43 = scalar_select %p40, %s41, %s42
      %p46 = pneg %p40
      %p47 = scmp.eq.s32.totalorder %s19, 2
      %p48 = por %p46, %p47
      %p49 = scmp.ne.s32.totalorder %s41, %s44
      %p50 = scmp.eq.s32.totalorder %s19, 0
      %p51 = por %p49, %p50
      %p52 = scmp.ne.s32.totalorder %s41, %s44
      %p53 = scmp.eq.s32.totalorder %s24, 2
      %p54 = por %p52, %p53
      %p55 = scmp.ne.s32.totalorder %s44, %s45
      %p56 = scmp.eq.s32.totalorder %s24, 0
      %p57 = por %p55, %p56
      %p58 = scmp.ne.s32.totalorder %s44, %s45
      %p59 = scmp.eq.s32.totalorder %s25, 2
      %p60 = por %p58, %p59
      %p62 = scmp.ne.s32.totalorder %s45, %s61
      %p63 = scmp.eq.s32.totalorder %s25, 0
      %p64 = por %p62, %p63
      %s65 = ssub.s32 %s27, %s34
      %p66 = scmp.eq.s32.totalorder %s65, 0
      %s68 = sadd.s32 %s67, 1
      %s69 = scalar_select %p66, %s67, %s68
      %p72 = pneg %p66
      %p73 = scmp.eq.s32.totalorder %s19, 2
      %p74 = por %p72, %p73
      %p75 = scmp.ne.s32.totalorder %s67, %s70
      %p76 = scmp.eq.s32.totalorder %s19, 0
      %p77 = por %p75, %p76
      %p78 = scmp.ne.s32.totalorder %s67, %s70
      %p79 = scmp.eq.s32.totalorder %s24, 2
      %p80 = por %p78, %p79
      %p81 = scmp.ne.s32.totalorder %s70, %s71
      %p82 = scmp.eq.s32.totalorder %s24, 0
      %p83 = por %p81, %p82
      %p84 = scmp.ne.s32.totalorder %s70, %s71
      %p85 = scmp.eq.s32.totalorder %s25, 2
      %p86 = por %p84, %p85
      %p88 = scmp.ne.s32.totalorder %s71, %s87
      %p89 = scmp.eq.s32.totalorder %s25, 0
      %p90 = por %p88, %p89
      %s91 = ssub.s32 %s26, %s38
      %p92 = scmp.eq.s32.totalorder %s91, 0
      %s94 = sadd.s32 %s93, 1
      %s95 = scalar_select %p92, %s93, %s94
      %p98 = pneg %p92
      %p99 = scmp.eq.s32.totalorder %s19, 2
      %p100 = por %p98, %p99
      %p101 = scmp.ne.s32.totalorder %s93, %s96
      %p102 = scmp.eq.s32.totalorder %s19, 0
      %p103 = por %p101, %p102
      %p104 = scmp.ne.s32.totalorder %s93, %s96
      %p105 = scmp.eq.s32.totalorder %s24, 2
      %p106 = por %p104, %p105
      %p107 = scmp.ne.s32.totalorder %s96, %s97
      %p108 = scmp.eq.s32.totalorder %s24, 0
      %p109 = por %p107, %p108
      %p110 = scmp.ne.s32.totalorder %s96, %s97
      %p111 = scmp.eq.s32.totalorder %s25, 2
      %p112 = por %p110, %p111
      %p114 = scmp.ne.s32.totalorder %s97, %s113
      %p115 = scmp.eq.s32.totalorder %s25, 0
      %p116 = por %p114, %p115
      %s117 = ssub.s32 %s26, %s38
      %s118 = ssub.s32 %s27, %s34
      %s119 = sor.u32 %s117, %s118
      %p120 = scmp.eq.s32.totalorder %s119, 0
      %s122 = sadd.s32 %s121, 1
      %s123 = scalar_select %p120, %s121, %s122
      %p126 = pneg %p120
      %p127 = scmp.eq.s32.totalorder %s19, 2
      %p128 = por %p126, %p127
      %p129 = scmp.ne.s32.totalorder %s121, %s124
      %p130 = scmp.eq.s32.totalorder %s19, 0
      %p131 = por %p129, %p130
      %p132 = scmp.ne.s32.totalorder %s121, %s124
      %p133 = scmp.eq.s32.totalorder %s24, 2
      %p134 = por %p132, %p133
      %p135 = scmp.ne.s32.totalorder %s124, %s125
      %p136 = scmp.eq.s32.totalorder %s24, 0
      %p137 = por %p135, %p136
      %p138 = scmp.ne.s32.totalorder %s124, %s125
      %p139 = scmp.eq.s32.totalorder %s25, 2
      %p140 = por %p138, %p139
      %p142 = scmp.ne.s32.totalorder %s125, %s141
      %p143 = scmp.eq.s32.totalorder %s25, 0
      %p144 = por %p142, %p143
      %p145 = scmp.le.s32.totalorder 1, %s19
      %p146 = scmp.lt.s32.totalorder %s19, 4
      %p147 = pnand %p145, %p146
      %p148 = pneg %p147
      // Predicated region
      $region9: #{tpu_custom_call.1} parent=5 // pred_check
        _
      $region10: #{tpu_custom_call.1} parent=5 // pred_check_branch
        %150 = sbr.rel (%p147) target = $region12
      $region11: #{tpu_custom_call.1} parent=5 // pred_region
        %s151 = ssub.s32 %s19, 1
        // Predicated region
        $region13: #{tpu_custom_call.1} parent=11 // pred_check
          %p152 = pneg %p57
        $region14: #{tpu_custom_call.1} parent=11 // pred_check_branch
          %154 = sbr.rel (%p152) target = $region16
        $region15: #{tpu_custom_call.1} parent=11 // pred_region
          %p155 = scmp.lt.s32.totalorder %s28, 0
          %s156 = scalar_select %p155, %s28, 0
          %s157 = smul.addr %s156, 8
          %s158 = scalar_lea.vmem %s1, %s157
        $region16: #{tpu_custom_call.1} parent=11 // pred_fallthru
          _
        // Predicated region
        $region17: #{tpu_custom_call.1} parent=11 // pred_check
          %p159 = pneg %p109
        $region18: #{tpu_custom_call.1} parent=11 // pred_check_branch
          %161 = sbr.rel (%p159) target = $region20
        $region19: #{tpu_custom_call.1} parent=11 // pred_region
          %p162 = scmp.lt.s32.totalorder %s28, 0
          %s163 = scalar_select %p162, %s28, 0
          %s164 = smul.addr %s163, 8
          %s165 = scalar_lea.vmem %s3, %s164
        $region20: #{tpu_custom_call.1} parent=11 // pred_fallthru
          _
      $region12: #{tpu_custom_call.1} parent=5 // pred_fallthru
        _
      %p166 = scmp.lt.s32.totalorder %s19, 3
      // Predicated region
      $region21: #{tpu_custom_call.1} parent=5 // pred_check
        %p167 = pneg %p166
      $region22: #{tpu_custom_call.1} parent=5 // pred_check_branch
        %169 = sbr.rel (%p167) target = $region24
      $region23: #{tpu_custom_call.1} parent=5 // pred_region
        // Predicated region
        $region25: #{tpu_custom_call.1} parent=23 // pred_check
          %p170 = pneg %p77
        $region26: #{tpu_custom_call.1} parent=23 // pred_check_branch
          %172 = sbr.rel (%p170) target = $region28
        $region27: #{tpu_custom_call.1} parent=23 // pred_region
          %s173 = smul.u32 16, %s27
          %p174 = scmp.lt.s32.totalorder %s173, 47
          %s175 = scalar_select %p174, %s173, 47
          %s176 = smul.addr %s175, 8
          %s177 = scalar_lea.vmem %s2, %s176
          %s178 = smul.u32 16, %s27
        $region28: #{tpu_custom_call.1} parent=23 // pred_fallthru
          _
      $region24: #{tpu_custom_call.1} parent=5 // pred_fallthru
        _
      %p179 = scmp.le.s32.totalorder 1, %s19
      %p180 = scmp.lt.s32.totalorder %s19, 4
      %p181 = pnand %p179, %p180
      %p182 = pneg %p181
      // Predicated region
      $region29: #{tpu_custom_call.1} parent=5 // pred_check
        _
      $region30: #{tpu_custom_call.1} parent=5 // pred_check_branch
        %184 = sbr.rel (%p181) target = $region32
      $region31: #{tpu_custom_call.1} parent=5 // pred_region
        %s185 = ssub.s32 %s19, 1
        %p186 = scmp.lt.s32.totalorder %s28, 0
        %s187 = scalar_select %p186, %s28, 0
        %s188 = smul.addr %s187, 8
        %s189 = scalar_lea.vmem %s1, %s188
        %p190 = pneg %p57
        %p191 = pneg %p54
        %s192 = smul.u32 16, %s29
        %p193 = scmp.lt.s32.totalorder %s192, 47
        %s194 = scalar_select %p193, %s192, 47
        %s195 = smul.addr %s194, 8
        %s196 = scalar_lea.vmem %s2, %s195
        %p197 = pneg %p83
        %p198 = pneg %p80
        %p199 = scmp.lt.s32.totalorder %s28, 0
        %s200 = scalar_select %p199, %s28, 0
        %s201 = smul.addr %s200, 8
        %s202 = scalar_lea.vmem %s3, %s201
        %p203 = pneg %p109
        %p204 = pneg %p106
        %p205 = pneg %p137
        %p206 = pneg %p134
        %s207 = sand.u32 %s124, 1
        %s208 = scalar_lea.sflag [#allocation5], %s207
        %s209 = sand.u32 %s124, 1
        %s210 = smul.addr %s209, 8
        %s211 = scalar_lea.vmem [#allocation4], %s210
        %p212 = scmp.lt.s32.totalorder %s28, 0
        %s213 = scalar_select %p212, %s28, 0
        %s214 = smul.addr %s213, 8
        %s215 = scalar_lea.vmem %s1, %s214
        %s216 = smul.u32 16, %s29
        %p217 = scmp.lt.s32.totalorder %s216, 47
        %s218 = scalar_select %p217, %s216, 47
        %s219 = smul.addr %s218, 8
        %s220 = scalar_lea.vmem %s2, %s219
        %s221 = smul.u32 16, %s29
        %p222 = scmp.lt.s32.totalorder %s28, 0
        %s223 = scalar_select %p222, %s28, 0
        %s224 = smul.addr %s223, 8
        %s225 = scalar_lea.vmem %s3, %s224
        %v226 = vld [vmem:[%s215] sm:$0xff]
        %v227 = vld [vmem:[%s220] sm:$0xff]
        %v228 = vld [vmem:[%s220 + $0x8] sm:$0xff]
        %v229 = vld [vmem:[%s220 + $0x10] sm:$0xff]
        %v230 = vld [vmem:[%s220 + $0x18] sm:$0xff]
        %v231 = vld [vmem:[%s220 + $0x20] sm:$0xff]
        %v232 = vld [vmem:[%s220 + $0x28] sm:$0xff]
        %v233 = vld [vmem:[%s220 + $0x30] sm:$0xff]
        %v234 = vld [vmem:[%s220 + $0x38] sm:$0xff]
        %v235 = vld [vmem:[%s220 + $0x40] sm:$0xff]
        %v236 = vld [vmem:[%s220 + $0x48] sm:$0xff]
        %v237 = vld [vmem:[%s220 + $0x50] sm:$0xff]
        %v238 = vld [vmem:[%s220 + $0x58] sm:$0xff]
        %v239 = vld [vmem:[%s220 + $0x60] sm:$0xff]
        %v240 = vld [vmem:[%s220 + $0x68] sm:$0xff]
        %v241 = vld [vmem:[%s220 + $0x70] sm:$0xff]
        %v242 = vld [vmem:[%s220 + $0x78] sm:$0xff]
        %vm243 = vcmask 261120
        %v245 = vsel %vm243, %v226, 0
        %v248 = vsel %vm243, %v227, 0
        %v251 = vsel %vm243, %v228, 0
        %v254 = vsel %vm243, %v229, 0
        %v257 = vsel %vm243, %v230, 0
        %v260 = vsel %vm243, %v231, 0
        %v263 = vsel %vm243, %v232, 0
        %v266 = vsel %vm243, %v233, 0
        %v269 = vsel %vm243, %v234, 0
        %v272 = vsel %vm243, %v235, 0
        %v275 = vsel %vm243, %v236, 0
        %v278 = vsel %vm243, %v237, 0
        %v281 = vsel %vm243, %v238, 0
        %v284 = vsel %vm243, %v239, 0
        %v287 = vsel %vm243, %v240, 0
        %v290 = vsel %vm243, %v241, 0
        %v293 = vsel %vm243, %v242, 0
        %295 = vmatprep.subr.mxu0 0.0
        %296 = vmatpush1.xpose.msra.mxu0 %v248
        %297 = vmatprep.subr.mxu0 0.0
        %298 = vmatpush1.xpose.msra.mxu0 %v251
        %299 = vmatprep.subr.mxu0 0.0
        %300 = vmatpush1.xpose.msra.mxu0 %v254
        %301 = vmatprep.subr.mxu0 0.0
        %302 = vmatpush1.xpose.msra.mxu0 %v257
        %303 = vmatprep.subr.mxu0 0.0
        %304 = vmatpush1.xpose.msra.mxu0 %v260
        %305 = vmatprep.subr.mxu0 0.0
        %306 = vmatpush1.xpose.msra.mxu0 %v263
        %307 = vmatprep.subr.mxu0 0.0
        %308 = vmatpush1.xpose.msra.mxu0 %v266
        %309 = vmatprep.subr.mxu0 0.0
        %310 = vmatpush1.xpose.msra.mxu0 %v269
        %311 = vmatprep.subr.mxu0 0.0
        %312 = vmatpush1.xpose.msra.mxu0 %v272
        %313 = vmatprep.subr.mxu0 0.0
        %314 = vmatpush1.xpose.msra.mxu0 %v275
        %315 = vmatprep.subr.mxu0 0.0
        %316 = vmatpush1.xpose.msra.mxu0 %v278
        %317 = vmatprep.subr.mxu0 0.0
        %318 = vmatpush1.xpose.msra.mxu0 %v281
        %319 = vmatprep.subr.mxu0 0.0
        %320 = vmatpush1.xpose.msra.mxu0 %v284
        %321 = vmatprep.subr.mxu0 0.0
        %322 = vmatpush1.xpose.msra.mxu0 %v287
        %323 = vmatprep.subr.mxu0 0.0
        %324 = vmatpush1.xpose.msra.mxu0 %v290
        %325 = vmatprep.subr.mxu0 0.0
        %326 = vmatpush1.xpose.msra.mxu0 %v293
        %327 = vmatprep.subr.mxu0 0.0
        %328 = vmatpush1.xpose.msra.mxu0 0.0
        %329 = vmatprep.subr.mxu0 0.0
        %330 = vmatpush1.xpose.msra.mxu0 0.0
        %331 = vmatprep.subr.mxu0 0.0
        %332 = vmatpush1.xpose.msra.mxu0 0.0
        %333 = vmatprep.subr.mxu0 0.0
        %334 = vmatpush1.xpose.msra.mxu0 0.0
        %335 = vmatprep.subr.mxu0 0.0
        %336 = vmatpush1.xpose.msra.mxu0 0.0
        %337 = vmatprep.subr.mxu0 0.0
        %338 = vmatpush1.xpose.msra.mxu0 0.0
        %339 = vmatprep.subr.mxu0 0.0
        %340 = vmatpush1.xpose.msra.mxu0 0.0
        %341 = vmatprep.subr.mxu0 0.0
        %342 = vmatpush1.xpose.msra.mxu0 0.0
        %343 = vmatprep.subr.mxu0 0.0
        %344 = vmatpush1.xpose.msra.mxu0 0.0
        %345 = vmatprep.subr.mxu0 0.0
        %346 = vmatpush1.xpose.msra.mxu0 0.0
        %347 = vmatprep.subr.mxu0 0.0
        %348 = vmatpush1.xpose.msra.mxu0 0.0
        %349 = vmatprep.subr.mxu0 0.0
        %350 = vmatpush1.xpose.msra.mxu0 0.0
        %351 = vmatprep.subr.mxu0 0.0
        %352 = vmatpush1.xpose.msra.mxu0 0.0
        %353 = vmatprep.subr.mxu0 0.0
        %354 = vmatpush1.xpose.msra.mxu0 0.0
        %355 = vmatprep.subr.mxu0 0.0
        %356 = vmatpush1.xpose.msra.mxu0 0.0
        %357 = vmatprep.subr.mxu0 0.0
        %358 = vmatpush1.xpose.msra.mxu0 0.0
        %359 = vmatprep.mubr.f32.mxu0 0.0
        %360 = vmatmul.mubr.f32.gmra.mrb[0].mxu0 %v245
        %v361 = vpop.f32.mrb[0].mxu0
        %v362 = vadd.f32 0.0, %v361
        %v363 = vpop.f32.mrb[0].mxu0
        %364 = vdwg.mxu0
        %s365 = sshra.s32 %s29, 7
        %s366 = sand.u32 %s29, 127
        %s367 = sadd.s32 %s365, %s28
        %s368 = smul.u32 %s367, 128
        %s369 = sshra.s32 %s29, 7
        %s370 = sand.u32 %s29, 127
        %s371 = sadd.s32 %s368, %s370
        %s372 = sld [smem:[#allocation3 + %s371]]
        %p373 = scmp.gt.s32.totalorder %s372, 0
        // Predicated region
        $region33: #{tpu_custom_call.1} parent=31 // pred_check
          %p374 = pneg %p373
        $region34: #{tpu_custom_call.1} parent=31 // pred_check_branch
          %376 = sbr.rel (%p374) target = $region36
        $region35: #{tpu_custom_call.1} parent=31 // pred_region
          %s377 = smul.u32 %s29, 128
          %v378 = vlaneseq
          %v379 = vand.u32 %v378, 127
          %v380 = vstv %s377
          %v381 = vadd.s32 %v380, %v379
          %v382 = vld [vmem:[%s225] sm:$0xff]
          %383 = vset.pattern.permute.xlu0 0
          %384 = vperm.xlu0 %383, %v382
          %v385 = vpop.permute.xlu0 %384
          %vm386 = vcmp.eq.s32.totalorder %v381, %v385
          %v387 = vmul.f32 %v362, %v362
          %v388 = vsub.f32 1.0, %v387
          %v389 = vmax.f32 %v388, 0.0
          %v390 = vrsqrt.pop %v389
          %v391 = vmul.f32 %v389, %v390
          %vm392 = vcmp.eq.f32.partialorder %v389, inf
          %v393 = vsel %vm392, %v389, %v391
          %vm394 = vcmp.eq.f32.partialorder %v389, 0.0
          %v395 = vand.u32 %v389, 2147483648
          %v396 = vsel %vm394, %v395, %v393
          %v397 = vmul.f32 %v362, 0.87758255
          %v398 = vmul.f32 %v396, 0.47942555
          %v399 = vsub.f32 %v397, %v398
          %vm400 = vcmp.gt.f32.partialorder %v362, -0.87758255
          %v401 = vsub.f32 %v362, 0.23971277
          %v402 = vsel %vm400, %v399, %v401
          %v403 = vsel %vm386, %v402, %v362
          %v404 = vmul.f32 %v403, 30.0
          %405 = vst [vmem:[%s211] sm:$0xff] %v404
        $region36: #{tpu_custom_call.1} parent=31 // pred_fallthru
          _
        %p406 = scmp.le.s32.totalorder %s372, 0
        // Predicated region
        $region37: #{tpu_custom_call.1} parent=31 // pred_check
          %p407 = pneg %p406
        $region38: #{tpu_custom_call.1} parent=31 // pred_check_branch
          %409 = sbr.rel (%p407) target = $region40
        $region39: #{tpu_custom_call.1} parent=31 // pred_region
          %v410 = vmul.f32 %v362, 30.0
          %411 = vst [vmem:[%s211] sm:$0xff] %v410
        $region40: #{tpu_custom_call.1} parent=31 // pred_fallthru
          _
        %s412 = sand.u32 %s124, 1
        %s413 = scalar_lea.sflag [#allocation5], %s412
        %s414 = sand.u32 %s124, 1
        %s415 = smul.addr %s414, 8
        %s416 = scalar_lea.vmem [#allocation4], %s415
        // Predicated region
        $region41: #{tpu_custom_call.1} parent=31 // pred_check
          %p417 = pneg %p134
        $region42: #{tpu_custom_call.1} parent=31 // pred_check_branch
          %419 = sbr.rel (%p417) target = $region44
        $region43: #{tpu_custom_call.1} parent=31 // pred_region
          %s421 = ssub.s32 128, 128
          %422 = vsyncadd %s413, %s421
          %s423 = smul.addr %s28, 3
          %s424 = sadd.s32 %s29, %s423
          %s425 = smul.addr %s424, 128
          %s426 = scalar_lea.hbm %s4, %s425
          %s428 = sshll.u32 %s416, 4
          %s429 = int_to_ptr.vmem [resolvable:$true] %s428
          %431 = dma.vmem_to_hbm [thread:$0]  %s429, 128, %s426, %s413
        $region44: #{tpu_custom_call.1} parent=31 // pred_fallthru
          _
      $region32: #{tpu_custom_call.1} parent=5 // pred_fallthru
        _
      %p432 = scmp.le.s32.totalorder 2, %s19
      // Predicated region
      $region45: #{tpu_custom_call.1} parent=5 // pred_check
        %p433 = pneg %p432
      $region46: #{tpu_custom_call.1} parent=5 // pred_check_branch
        %435 = sbr.rel (%p433) target = $region48
      $region47: #{tpu_custom_call.1} parent=5 // pred_region
        %s436 = ssub.s32 %s19, 2
        // Predicated region
        $region49: #{tpu_custom_call.1} parent=47 // pred_check
          %p437 = pneg %p140
        $region50: #{tpu_custom_call.1} parent=47 // pred_check_branch
          %439 = sbr.rel (%p437) target = $region52
        $region51: #{tpu_custom_call.1} parent=47 // pred_region
          %s440 = sand.u32 %s125, 1
          %s441 = scalar_lea.sflag [#allocation5], %s440
          %s442 = sand.u32 %s125, 1
          %s443 = smul.addr %s442, 8
          %s444 = scalar_lea.vmem [#allocation4], %s443
          %445 = dma.done %s441, 128
        $region52: #{tpu_custom_call.1} parent=47 // pred_fallthru
          _
      $region48: #{tpu_custom_call.1} parent=5 // pred_fallthru
        _
    $region6: #{tpu_custom_call.1} parent=1 // loop_footer
      %s23 = sadd.s32 1, %s19
    $region7: #{tpu_custom_call.1} parent=1 // loop_footer_branch
      %18 = sbr.rel target = $region3
    $region8: #{tpu_custom_call.1} parent=1 // loop_exit
      _
    %446 = vsyncpa [#allocation5], 1
    %s447 = scalar_lea.sflag [#allocation5], 1
    %448 = vsyncpa %s447, 1

</llo_original>
